<compile_context>
chip_gen: v7x
topology: tpu7x:2x2x1
jax: 0.10.0
libtpu: 0.0.40
codegen_flags: <defaults>
</compile_context>

<pallas_src>
import functools

import jax
import jax.numpy as jnp
from jax.experimental import pallas as pl
from jax.experimental.pallas import tpu as pltpu

EPS = 1e-12          # F.normalize default eps (clamp on the norm)
_LANES = 128
_MAX_BLOCK_B = 1024  # batch lanes per grid step


def _round_up(n, m):
    return (n + m - 1) // m * m


def _linear_normalize_kernel(w_ref, b_ref, x_ref, o_ref, sumsq_ref, *,
                             n_valid, block_b, n_blocks, has_pad):
    # w_ref:     (K,)                f32 SMEM (scalar weights)
    # b_ref:     (1,)                f32 SMEM (scalar bias)
    # x_ref:     (K, block_b)        f32 VMEM tile for this grid step
    # o_ref:     (n_blocks, block_b) f32 VMEM, resident across the whole grid
    # sumsq_ref: (1, 1)              f32 VMEM scratch (running sum of squares)
    i = pl.program_id(0)

    @pl.when(i == 0)
    def _init():
        sumsq_ref[...] = jnp.zeros_like(sumsq_ref)

    x = x_ref[...]                                     # (K, block_b)
    k_feat = x.shape[0]

    # Linear(K, 1): unrolled VPU multiply-add over sublane rows with scalar
    # weights broadcast from SMEM. (Deliberately NOT an MXU matmul.)
    y = w_ref[0] * x[0:1, :]                           # (1, block_b)
    for k in range(1, k_feat):
        y = y + w_ref[k] * x[k:k + 1, :]
    y = y + b_ref[0]

    # Accumulate sum(y^2), excluding padded batch lanes (only the final block
    # can contain padding; the comparison is trivially true elsewhere).
    if has_pad:
        lane = jax.lax.broadcasted_iota(jnp.int32, (1, block_b), 1)
        y_valid = jnp.where(lane < (n_valid - i * block_b), y, 0.0)
    else:
        y_valid = y
    sumsq_ref[...] += jnp.sum(y_valid * y_valid, keepdims=True)   # (1, 1)

    # Stash the un-normalized y into row i of the resident output.
    o_ref[pl.ds(i, 1), :] = y

    # Last step: scale the whole resident output by 1 / max(||y||_2, EPS).
    @pl.when(i == n_blocks - 1)
    def _finalize():
        inv = jax.lax.rsqrt(jnp.maximum(sumsq_ref[...], EPS * EPS))  # (1, 1)
        o_ref[...] = o_ref[...] * inv


@functools.partial(jax.jit, static_argnames=("block_b",))
def linear_normalize(x, weight, bias, *, block_b=_MAX_BLOCK_B):
    """x: (B, K) f32, weight: (1, K) f32, bias: (1,) f32 -> (B, 1) f32."""
    B, K = x.shape
    block_b = min(block_b, _round_up(B, _LANES))   # multiple of 128
    B_pad = _round_up(B, block_b)
    n_blocks = B_pad // block_b

    # Lane-dense layout: batch on lanes, features on sublanes.
    xt = jnp.pad(x.T.astype(jnp.float32), ((0, 0), (0, B_pad - B)))  # (K, B_pad)
    w_flat = weight.reshape(K).astype(jnp.float32)                   # (K,)  SMEM
    b_flat = bias.reshape(1).astype(jnp.float32)                     # (1,)  SMEM

    kernel = functools.partial(
        _linear_normalize_kernel,
        n_valid=B, block_b=block_b, n_blocks=n_blocks,
        has_pad=(B_pad != B))

    out = pl.pallas_call(
        kernel,
        out_shape=jax.ShapeDtypeStruct((n_blocks, block_b), jnp.float32),
        grid=(n_blocks,),
        in_specs=[
            pl.BlockSpec(memory_space=pltpu.MemorySpace.SMEM),   # weight (K,)
            pl.BlockSpec(memory_space=pltpu.MemorySpace.SMEM),   # bias (1,)
            pl.BlockSpec((K, block_b), lambda i: (0, i)),        # x tile (VMEM)
        ],
        out_specs=pl.BlockSpec((n_blocks, block_b), lambda i: (0, 0)),  # resident
        scratch_shapes=[pltpu.VMEM((1, 1), jnp.float32)],
        compiler_params=pltpu.CompilerParams(
            dimension_semantics=("arbitrary",)),
    )(w_flat, b_flat, xt)

    # Back to (B, 1): row-major flatten of (n_blocks, block_b) == batch order.
    return out.reshape(-1)[:B].reshape(B, 1)


def reference(x, weight, bias):
    y = x @ weight.T + bias[None, :]
    norm = jnp.sqrt(jnp.sum(y * y, axis=0, keepdims=True))
    return y / jnp.maximum(norm, EPS)


if __name__ == "__main__":
    key = jax.random.PRNGKey(0)
    kx, kw, kb = jax.random.split(key, 3)

    B, IN, OUT = 8, 4, 1
    x = jax.random.normal(kx, (B, IN), dtype=jnp.float32)

    # Deterministic parameter init (uniform bound like nn.Linear's default).
    bound = 1.0 / jnp.sqrt(jnp.float32(IN))
    weight = jax.random.uniform(kw, (OUT, IN), dtype=jnp.float32,
                                minval=-bound, maxval=bound)
    bias = jax.random.uniform(kb, (OUT,), dtype=jnp.float32,
                              minval=-bound, maxval=bound)

    out = jax.block_until_ready(linear_normalize(x, weight, bias))
    ref = reference(x, weight, bias)
    assert out.shape == (B, OUT)
    assert jnp.allclose(out, ref, atol=1e-5, rtol=1e-5)

    # Also exercise the tiled multi-block path + padded-lane masking.
    B2 = 2500
    x2 = jax.random.normal(jax.random.PRNGKey(1), (B2, IN), dtype=jnp.float32)
    out2 = jax.block_until_ready(linear_normalize(x2, weight, bias))
    ref2 = reference(x2, weight, bias)
    assert out2.shape == (B2, OUT)
    assert jnp.allclose(out2, ref2, atol=1e-5, rtol=1e-5)

    # Exact multiple of the block size (no padding -> mask code not emitted).
    B3 = 1024
    x3 = jax.random.normal(jax.random.PRNGKey(2), (B3, IN), dtype=jnp.float32)
    out3 = jax.block_until_ready(linear_normalize(x3, weight, bias))
    ref3 = reference(x3, weight, bias)
    assert out3.shape == (B3, OUT)
    assert jnp.allclose(out3, ref3, atol=1e-5, rtol=1e-5)

    print("KERNEL_OK")
</pallas_src>

<mosaic_0001>
module attributes {stable_mosaic.version = 11 : i64} {
  func.func @_linear_normalize_kernel(%arg0: i32, %arg1: memref<4xf32, #tpu.memory_space<smem>>, %arg2: memref<1xf32, #tpu.memory_space<smem>>, %arg3: memref<4x128xf32, #tpu.memory_space<vmem>>, %arg4: memref<1x128xf32, #tpu.memory_space<vmem>>, %arg5: memref<1x1xf32, #tpu.memory_space<vmem>>) attributes {dimension_semantics = [#tpu.dimension_semantics<arbitrary>], iteration_bounds = array<i64: 1>, scalar_prefetch = 0 : i64, scratch_operands = 1 : i64, tpu.core_type = #tpu.core_type<tc>, window_params = [{transform_indices = @transform_0, window_bounds = array<i64: 4>}, {transform_indices = @transform_1, window_bounds = array<i64: 1>}, {transform_indices = @transform_2, window_bounds = array<i64: 4, 128>}, {pipeline_mode = #tpu.pipeline_mode<synchronous>, transform_indices = @transform_3, window_bounds = array<i64: 1, 128>}]} {
    %c0_i32 = arith.constant 0 : i32
    %0 = arith.cmpi eq, %arg0, %c0_i32 : i32
    %1 = arith.extui %0 : i1 to i32
    %c0_i32_0 = arith.constant 0 : i32
    %2 = arith.cmpi ne, %1, %c0_i32_0 : i32
    scf.if %2 {
      %cst_12 = arith.constant 0.000000e+00 : f32
      %47 = vector.broadcast %cst_12 : f32 to vector<1x1xf32>
      %c0_13 = arith.constant 0 : index
      %c0_14 = arith.constant 0 : index
      %48 = vector.load %arg5[%c0_13, %c0_14] : memref<1x1xf32, #tpu.memory_space<vmem>>, vector<1x1xf32>
      tpu.vector_store %arg5[%c0_13, %c0_14], %47 {strides = array<i32>} : memref<1x1xf32, #tpu.memory_space<vmem>>, vector<1x1xf32>,
    } else {
    }
    %c0 = arith.constant 0 : index
    %c0_1 = arith.constant 0 : index
    %3 = vector.load %arg3[%c0, %c0_1] : memref<4x128xf32, #tpu.memory_space<vmem>>, vector<4x128xf32>
    %c0_2 = arith.constant 0 : index
    %4 = memref.load %arg1[%c0_2] : memref<4xf32, #tpu.memory_space<smem>>
    %5 = vector.extract_strided_slice %3 {offsets = [0, 0], sizes = [1, 128], strides = [1, 1]} : vector<4x128xf32> to vector<1x128xf32>
    %6 = vector.broadcast %4 : f32 to vector<1x128xf32>
    %7 = arith.mulf %6, %5 : vector<1x128xf32>
    %c1 = arith.constant 1 : index
    %8 = memref.load %arg1[%c1] : memref<4xf32, #tpu.memory_space<smem>>
    %9 = vector.extract_strided_slice %3 {offsets = [1, 0], sizes = [1, 128], strides = [1, 1]} : vector<4x128xf32> to vector<1x128xf32>
    %10 = vector.broadcast %8 : f32 to vector<1x128xf32>
    %11 = arith.mulf %10, %9 : vector<1x128xf32>
    %12 = arith.addf %7, %11 : vector<1x128xf32>
    %c2 = arith.constant 2 : index
    %13 = memref.load %arg1[%c2] : memref<4xf32, #tpu.memory_space<smem>>
    %14 = vector.extract_strided_slice %3 {offsets = [2, 0], sizes = [1, 128], strides = [1, 1]} : vector<4x128xf32> to vector<1x128xf32>
    %15 = vector.broadcast %13 : f32 to vector<1x128xf32>
    %16 = arith.mulf %15, %14 : vector<1x128xf32>
    %17 = arith.addf %12, %16 : vector<1x128xf32>
    %c3 = arith.constant 3 : index
    %18 = memref.load %arg1[%c3] : memref<4xf32, #tpu.memory_space<smem>>
    %19 = vector.extract_strided_slice %3 {offsets = [3, 0], sizes = [1, 128], strides = [1, 1]} : vector<4x128xf32> to vector<1x128xf32>
    %20 = vector.broadcast %18 : f32 to vector<1x128xf32>
    %21 = arith.mulf %20, %19 : vector<1x128xf32>
    %22 = arith.addf %17, %21 : vector<1x128xf32>
    %c0_3 = arith.constant 0 : index
    %23 = memref.load %arg2[%c0_3] : memref<1xf32, #tpu.memory_space<smem>>
    %24 = vector.broadcast %23 : f32 to vector<1x128xf32>
    %25 = arith.addf %22, %24 : vector<1x128xf32>
    %26 = tpu.iota {dimensions = array<i32: 1>} : vector<1x128xi32>
    %c128_i32 = arith.constant 128 : i32
    %27 = arith.muli %arg0, %c128_i32 : i32
    %c8_i32 = arith.constant 8 : i32
    %28 = arith.subi %c8_i32, %27 : i32
    %29 = vector.broadcast %28 : i32 to vector<1x128xi32>
    %30 = arith.cmpi slt, %26, %29 : vector<1x128xi32>
    %cst = arith.constant 0.000000e+00 : f32
    %31 = vector.broadcast %cst : f32 to vector<1x128xf32>
    %32 = arith.select %30, %25, %31 : vector<1x128xi1>, vector<1x128xf32>
    %c0_4 = arith.constant 0 : index
    %c0_5 = arith.constant 0 : index
    %33 = vector.load %arg5[%c0_4, %c0_5] : memref<1x1xf32, #tpu.memory_space<vmem>>, vector<1x1xf32>
    %34 = arith.mulf %32, %32 : vector<1x128xf32>
    %35 = vector.shape_cast %34 : vector<1x128xf32> to vector<1x1x128xf32>
    %cst_6 = arith.constant dense<0.000000e+00> : vector<1xf32>
    %36 = vector.multi_reduction <add>, %35, %cst_6 [1, 2] : vector<1x1x128xf32> to vector<1xf32>
    %37 = vector.shape_cast %36 : vector<1xf32> to vector<1x1x1xf32>
    %38 = vector.extract %37[0, 0, 0] : f32 from vector<1x1x1xf32>
    %39 = vector.broadcast %38 : f32 to vector<1x1xf32>
    %40 = arith.addf %33, %39 : vector<1x1xf32>
    %c0_7 = arith.constant 0 : index
    %c0_8 = arith.constant 0 : index
    %41 = vector.load %arg5[%c0_7, %c0_8] : memref<1x1xf32, #tpu.memory_space<vmem>>, vector<1x1xf32>
    tpu.vector_store %arg5[%c0_7, %c0_8], %40 {strides = array<i32>} : memref<1x1xf32, #tpu.memory_space<vmem>>, vector<1x1xf32>,
    %42 = arith.index_cast %arg0 : i32 to index
    %c0_9 = arith.constant 0 : index
    %43 = vector.load %arg4[%42, %c0_9] : memref<1x128xf32, #tpu.memory_space<vmem>>, vector<1x128xf32>
    tpu.vector_store %arg4[%42, %c0_9], %25 {strides = array<i32>} : memref<1x128xf32, #tpu.memory_space<vmem>>, vector<1x128xf32>,
    %c0_i32_10 = arith.constant 0 : i32
    %44 = arith.cmpi eq, %arg0, %c0_i32_10 : i32
    %45 = arith.extui %44 : i1 to i32
    %c0_i32_11 = arith.constant 0 : i32
    %46 = arith.cmpi ne, %45, %c0_i32_11 : i32
    scf.if %46 {
      %c0_12 = arith.constant 0 : index
      %c0_13 = arith.constant 0 : index
      %47 = vector.load %arg5[%c0_12, %c0_13] : memref<1x1xf32, #tpu.memory_space<vmem>>, vector<1x1xf32>
      %cst_14 = arith.constant 1.000000e-24 : f32
      %48 = vector.broadcast %cst_14 : f32 to vector<1x1xf32>
      %49 = arith.maximumf %47, %48 : vector<1x1xf32>
      %50 = math.rsqrt %49 : vector<1x1xf32>
      %c0_15 = arith.constant 0 : index
      %c0_16 = arith.constant 0 : index
      %51 = vector.load %arg4[%c0_15, %c0_16] : memref<1x128xf32, #tpu.memory_space<vmem>>, vector<1x128xf32>
      %52 = vector.broadcast %50 : vector<1x1xf32> to vector<1x128xf32>
      %53 = arith.mulf %51, %52 : vector<1x128xf32>
      %c0_17 = arith.constant 0 : index
      %c0_18 = arith.constant 0 : index
      %54 = vector.load %arg4[%c0_17, %c0_18] : memref<1x128xf32, #tpu.memory_space<vmem>>, vector<1x128xf32>
      tpu.vector_store %arg4[%c0_17, %c0_18], %53 {strides = array<i32>} : memref<1x128xf32, #tpu.memory_space<vmem>>, vector<1x128xf32>,
    } else {
    }
    return
  }
  func.func @transform_0(%arg0: i32) -> i32 {
    %c0_i32 = arith.constant 0 : i32
    %c0_i32_0 = arith.constant 0 : i32
    return %c0_i32 : i32
  }
  func.func @transform_1(%arg0: i32) -> i32 {
    %c0_i32 = arith.constant 0 : i32
    %c0_i32_0 = arith.constant 0 : i32
    return %c0_i32 : i32
  }
  func.func @transform_2(%arg0: i32) -> (i32, i32) {
    %c0_i32 = arith.constant 0 : i32
    %c0_i32_0 = arith.constant 0 : i32
    return %c0_i32, %arg0 : i32, i32
  }
  func.func @transform_3(%arg0: i32) -> (i32, i32) {
    %c0_i32 = arith.constant 0 : i32
    %c0_i32_0 = arith.constant 0 : i32
    %c0_i32_1 = arith.constant 0 : i32
    return %c0_i32, %c0_i32_0 : i32, i32
  }
}

</mosaic_0001>

<llo_original>
// kernel: linear_normalize.1
$region0: #{linear_normalize.1}
  #allocation0 [shape = 'u32[]', space=smem, size = 0x4, offset = 0x4, fixed_abs, tag = 'smem constant byte address 0x4 - core index']
  #allocation1 [shape = 'u32[144,128]{1,0:T(1,128)}', space=vmem, size = 0x12000, scoped, tag = 'internal scratch']
  #allocation2 [shape = 'f32[1,1]{1,0:T(1,128)}', space=vmem, size = 0x200, scoped, tag = 'scratch operand']
  #allocation3 [shape = 'f32[1]{0:T(128)S(6)}', space=smem, size = 0x200, scoped, tag = 'scoped memory for linear_normalize.1']
  %s0 = inlined_call_operand.vmem [shape: f32[4], index: 0, kind: input, shape index: {}]
  %s1 = inlined_call_operand.<no memory space> [shape: f32[1], index: 1, kind: input, shape index: {}]
  %s2 = inlined_call_operand.vmem [shape: f32[4,128], index: 2, kind: input, shape index: {}]
  %s3 = inlined_call_operand.vmem [shape: f32[1,128], index: 3, kind: output, shape index: {}]
  %s4 = sld [smem:[#allocation0]]
  $region34: #{linear_normalize.1} parent=0
    _
  %s6 = ssub.s32 1, %s4
  %s7 = scalar_select 0, %s6, %s4
  %8 = sst [smem:[#allocation3]] %s1
  $region1: #{linear_normalize.1} parent=0
    #allocation4 [shape = 'u8[512]{0}', space=smem, size = 0x200, scoped, tag = 'input window, operand 0, single buffered']
    #allocation5 [shape = 's32[1]{0}', space=sflag, size = 0x4, scoped, tag = 'scoped memory for linear_normalize.1']
    %9 = vsyncpa [#allocation5], 0
    // Predicated region
    $region2: #{linear_normalize.1} parent=1 // pred_check
      _
    $region3: #{linear_normalize.1} parent=1 // pred_check_branch
      %11 = sbr.rel (0) target = $region5
    $region4: #{linear_normalize.1} parent=1 // pred_region
      %s13 = ssub.s32 16, 16
      %14 = vsyncadd [#allocation5], %s13
      %s16 = sshll.u32 %s0, 4
      %s17 = int_to_ptr.vmem [resolvable:$true] %s16
      %19 = dma.vmem_to_smem %s17, 16, [#allocation4], [#allocation5]
    $region5: #{linear_normalize.1} parent=1 // pred_fallthru
      _
    // Predicated region
    $region6: #{linear_normalize.1} parent=1 // pred_check
      _
    $region7: #{linear_normalize.1} parent=1 // pred_check_branch
      %21 = sbr.rel (0) target = $region9
    $region8: #{linear_normalize.1} parent=1 // pred_region
      _
    $region9: #{linear_normalize.1} parent=1 // pred_fallthru
      _
    // Predicated region
    $region10: #{linear_normalize.1} parent=1 // pred_check
      _
    $region11: #{linear_normalize.1} parent=1 // pred_check_branch
      %23 = sbr.rel (0) target = $region13
    $region12: #{linear_normalize.1} parent=1 // pred_region
      _
    $region13: #{linear_normalize.1} parent=1 // pred_fallthru
      _
    // Predicated region
    $region14: #{linear_normalize.1} parent=1 // pred_check
      _
    $region15: #{linear_normalize.1} parent=1 // pred_check_branch
      %25 = sbr.rel (0) target = $region17
    $region16: #{linear_normalize.1} parent=1 // pred_region
      %26 = dma.done [#allocation5], 16
    $region17: #{linear_normalize.1} parent=1 // pred_fallthru
      _
    %27 = sfence
    %p28 = scmp.eq.s32.totalorder 0, 0
    // Predicated region
    $region18: #{linear_normalize.1} parent=1 // pred_check
      %p29 = pneg %p28
    $region19: #{linear_normalize.1} parent=1 // pred_check_branch
      %31 = sbr.rel (%p29) target = $region21
    $region20: #{linear_normalize.1} parent=1 // pred_region
      %vm32 = vcmask 0
      %33 = vst.msk [vmem:[#allocation2] sm:$0x1] %vm32, 0.0
    $region21: #{linear_normalize.1} parent=1 // pred_fallthru
      _
    %v34 = vld [vmem:[%s2] sm:$0xf]
    %s35 = sld [smem:[#allocation4]]
    %v36 = vstv %s35
    %v37 = vmul.f32 %v36, %v34
    %s38 = sld [smem:[#allocation4 + $0x1]]
    %v39 = vstv %s38
    %v40 = vmul.f32 %v39, %v34
    %v42 = vrot.slane %v40, 1
    %v44 = vadd.f32 %v37, %v42
    %s45 = sld [smem:[#allocation4 + $0x2]]
    %v46 = vstv %s45
    %v47 = vmul.f32 %v46, %v34
    %v49 = vrot.slane %v47, 2
    %v51 = vadd.f32 %v44, %v49
    %s52 = sld [smem:[#allocation4 + $0x3]]
    %v53 = vstv %s52
    %v54 = vmul.f32 %v53, %v34
    %v56 = vrot.slane %v54, 3
    %v58 = vadd.f32 %v51, %v56
    %s59 = sld [smem:[#allocation3]]
    %v60 = vstv %s59
    %v61 = vadd.f32 %v58, %v60
    %v62 = vlaneseq
    %v63 = vand.u32 %v62, 127
    %s64 = smul.u32 0, 128
    %s65 = ssub.s32 8, %s64
    %v66 = vstv %s65
    %vm67 = vcmp.lt.s32.totalorder %v63, %v66
    %v68 = vsel %vm67, %v61, 0.0
    %v69 = vld [vmem:[#allocation2] sm:$0x1]
    %v70 = vmul.f32 %v68, %v68
    %vm71 = vcmask 1040384
    %v72 = vsel %vm71, %v70, 0.0
    %73 = vadd.xlane.f32.xlu0 %v72
    %v74 = vpop.xlane.xlu0 %73
    %v75 = vrot.slane %v74, 4
    %v76 = vadd.f32 %v74, %v75
    %v77 = vrot.slane %v76, 2
    %v78 = vadd.f32 %v76, %v77
    %v79 = vrot.slane %v78, 1
    %v80 = vadd.f32 %v78, %v79
    %s81 = vtos %v80
    %v82 = vstv %s81
    %v83 = vadd.f32 %v69, %v82
    %vm84 = vcmask 0
    %85 = vst.msk [vmem:[#allocation2] sm:$0x1] %vm84, %v83
    %86 = vst [vmem:[%s3] sm:$0x1] %v61
    // Predicated region
    $region22: #{linear_normalize.1} parent=1 // pred_check
      %p87 = pneg %p28
    $region23: #{linear_normalize.1} parent=1 // pred_check_branch
      %89 = sbr.rel (%p87) target = $region25
    $region24: #{linear_normalize.1} parent=1 // pred_region
      %v90 = vld [vmem:[#allocation2] sm:$0x1]
      %v91 = vmax.f32 %v90, 1e-24
      %v92 = vrsqrt.pop %v91
      %v93 = vld [vmem:[%s3] sm:$0x1]
      %95 = vset.pattern.permute.xlu0 0
      %96 = vperm.xlu0 %95, %v92
      %v97 = vpop.permute.xlu0 %96
      %v99 = vlaneseq
      %v100 = vshrl.u32 %v99, 7
      %v101 = vsub.s32 0, %v100
      %v102 = vrot.slane %v97, %v101
      %v103 = vmul.f32 %v93, %v102
      %104 = vst [vmem:[%s3] sm:$0x1] %v103
    $region25: #{linear_normalize.1} parent=1 // pred_fallthru
      _
    // Predicated region
    $region26: #{linear_normalize.1} parent=1 // pred_check
      _
    $region27: #{linear_normalize.1} parent=1 // pred_check_branch
      %106 = sbr.rel (0) target = $region29
    $region28: #{linear_normalize.1} parent=1 // pred_region
      _
    $region29: #{linear_normalize.1} parent=1 // pred_fallthru
      _
    // Predicated region
    $region30: #{linear_normalize.1} parent=1 // pred_check
      _
    $region31: #{linear_normalize.1} parent=1 // pred_check_branch
      %108 = sbr.rel (0) target = $region33
    $region32: #{linear_normalize.1} parent=1 // pred_region
      _
    $region33: #{linear_normalize.1} parent=1 // pred_fallthru
      _
    %109 = vsyncpa [#allocation5], 1

</llo_original>
